<compile_context>
chip_gen: v6e
topology: v6e:2x2x1
jax: 0.10.0
libtpu: 0.0.40
codegen_flags: <defaults>
</compile_context>

<pallas_src>
import functools

import jax
import jax.numpy as jnp
from jax.experimental import pallas as pl
from jax.experimental.pallas import tpu as pltpu


def make_banded_weights(w_hwio, W):
    """Fold the kW-tap (SAME-padded) conv along width into a banded matmul.

    Returns band of shape (kH, W*Cin, W*Cout) such that for each row tap dy:
        out_rows(H, W*Cout) += in_rows(H, W*Cin) @ band[dy]
    Boundary (width-padding) taps are zero blocks, so no width padding is
    needed on the activations.
    """
    kH, kW, Cin, Cout = w_hwio.shape
    src = jnp.arange(W)[:, None]           # input column index
    dst = jnp.arange(W)[None, :]           # output column index
    # Cross-correlation (PyTorch/XLA conv): out[dst] += in[dst + dx - pad] * w[dx]
    # => input column src feeds output column dst through tap dx = src - dst + pad.
    dx = src - dst + (kW // 2)
    valid = (dx >= 0) & (dx < kW)
    dx_c = jnp.clip(dx, 0, kW - 1)
    blocks = w_hwio[:, dx_c]                                   # (kH, Wsrc, Wdst, Cin, Cout)
    blocks = jnp.where(valid[None, :, :, None, None], blocks, 0.0)
    # (kH, src, dst, Cin, Cout) -> (kH, src, Cin, dst, Cout) -> (kH, W*Cin, W*Cout)
    return blocks.transpose(0, 1, 3, 2, 4).reshape(kH, W * Cin, W * Cout)


def _fused_backbone_kernel(x_ref, wb1_ref, b1_ref, wb2_ref, b2_ref,
                           o1_ref, o2_ref, xp_ref, h1p_ref,
                           *, H, W, Cin, C1, C2):
    """Fused conv3x3+bias+ReLU (x2) for one batch element, lane-dense slabs.

    x_ref   : (1, H, W*Cin)        input slab
    wb1_ref : (3, W*Cin, W*C1)     banded conv1 weights (one matrix per row tap)
    b1_ref  : (1, W*C1)            conv1 bias tiled onto the lane axis
    wb2_ref : (3, W*C1, W*C2)      banded conv2 weights
    b2_ref  : (1, W*C2)            conv2 bias tiled onto the lane axis
    o1_ref  : (1, H, W*C1)         relu1 output slab (hooked)
    o2_ref  : (1, H, W*C2)         relu2 output slab (hooked)
    xp_ref  : (H+2, W*Cin) VMEM    row-halo staging for the input
    h1p_ref : (H+2, W*C1)  VMEM    row-halo staging for h1 (no HBM round trip)
    """
    # ---- stage input with a 1-row zero halo (SAME padding in H) ----
    xp_ref[pl.ds(0, 1), :] = jnp.zeros((1, W * Cin), jnp.float32)
    xp_ref[pl.ds(H + 1, 1), :] = jnp.zeros((1, W * Cin), jnp.float32)
    xp_ref[pl.ds(1, H), :] = x_ref[0]

    # ---- conv1 as 3 lane-dense MXU matmuls: (H, W*Cin) @ (W*Cin, W*C1) ----
    acc1 = jnp.dot(xp_ref[pl.ds(0, H), :], wb1_ref[0],
                   preferred_element_type=jnp.float32)
    acc1 = acc1 + jnp.dot(xp_ref[pl.ds(1, H), :], wb1_ref[1],
                          preferred_element_type=jnp.float32)
    acc1 = acc1 + jnp.dot(xp_ref[pl.ds(2, H), :], wb1_ref[2],
                          preferred_element_type=jnp.float32)
    h1 = jnp.maximum(acc1 + b1_ref[...], 0.0)          # bias + ReLU, once
    o1_ref[0] = h1.astype(o1_ref.dtype)                 # hooked "relu1"

    # ---- keep h1 in VMEM (row-padded) and feed conv2 directly ----
    h1p_ref[pl.ds(0, 1), :] = jnp.zeros((1, W * C1), jnp.float32)
    h1p_ref[pl.ds(H + 1, 1), :] = jnp.zeros((1, W * C1), jnp.float32)
    h1p_ref[pl.ds(1, H), :] = h1

    acc2 = jnp.dot(h1p_ref[pl.ds(0, H), :], wb2_ref[0],
                   preferred_element_type=jnp.float32)
    acc2 = acc2 + jnp.dot(h1p_ref[pl.ds(1, H), :], wb2_ref[1],
                          preferred_element_type=jnp.float32)
    acc2 = acc2 + jnp.dot(h1p_ref[pl.ds(2, H), :], wb2_ref[2],
                          preferred_element_type=jnp.float32)
    o2_ref[0] = jnp.maximum(acc2 + b2_ref[...], 0.0).astype(o2_ref.dtype)


@jax.jit
def _forward_impl(x_nchw, wb1, b1_lane, wb2, b2_lane):
    N, C, H, W = x_nchw.shape
    C1 = b1_lane.shape[-1] // W
    C2 = b2_lane.shape[-1] // W
    # NCHW -> NHWC -> lane-dense (N, H, W*C) slab (layout plumbing only).
    x_slab = jnp.transpose(x_nchw, (0, 2, 3, 1)).reshape(N, H, W * C)

    kern = functools.partial(_fused_backbone_kernel,
                             H=H, W=W, Cin=C, C1=C1, C2=C2)
    o1, o2 = pl.pallas_call(
        kern,
        out_shape=(
            jax.ShapeDtypeStruct((N, H, W * C1), x_slab.dtype),
            jax.ShapeDtypeStruct((N, H, W * C2), x_slab.dtype),
        ),
        grid=(N,),
        in_specs=[
            pl.BlockSpec((1, H, W * C), lambda n: (n, 0, 0)),
            pl.BlockSpec((3, W * C, W * C1), lambda n: (0, 0, 0)),
            pl.BlockSpec((1, W * C1), lambda n: (0, 0)),
            pl.BlockSpec((3, W * C1, W * C2), lambda n: (0, 0, 0)),
            pl.BlockSpec((1, W * C2), lambda n: (0, 0)),
        ],
        out_specs=(
            pl.BlockSpec((1, H, W * C1), lambda n: (n, 0, 0)),
            pl.BlockSpec((1, H, W * C2), lambda n: (n, 0, 0)),
        ),
        scratch_shapes=[
            pltpu.VMEM((H + 2, W * C), jnp.float32),   # row-padded input
            pltpu.VMEM((H + 2, W * C1), jnp.float32),  # row-padded h1
        ],
        compiler_params=pltpu.CompilerParams(
            dimension_semantics=("parallel",)),        # megacore on v7x
    )(x_slab, wb1, b1_lane, wb2, b2_lane)

    # Back to PyTorch NCHW convention for the hooked outputs.
    h1 = jnp.transpose(o1.reshape(N, H, W, C1), (0, 3, 1, 2))
    h2 = jnp.transpose(o2.reshape(N, H, W, C2), (0, 3, 1, 2))
    return h1, h2


class PerceptualOutputLayerPallas:
    """JAX/Pallas equivalent of PerceptualOutputLayer with a 2-conv backbone.

    Parameters are frozen (inference only, matching requires_grad=False /
    .eval()).  forward(x) runs the backbone and returns the list of hooked
    layer outputs (relu1, relu2), each in NCHW like PyTorch.
    """
    # TODO(synk): the generic nn.Module backbone + register_forward_hook
    # machinery has no Pallas equivalent; a concrete 2-conv backbone is baked
    # in and the "hooks" are the fused kernel's two outputs.

    def __init__(self, key, in_ch=4, mid_ch=8, out_ch=16, spatial_w=16,
                 perceptual_layers=("relu1", "relu2")):
        k1, k2, k3, k4 = jax.random.split(key, 4)
        self.in_ch, self.mid_ch, self.out_ch, self.W = in_ch, mid_ch, out_ch, spatial_w
        # Raw HWIO weights (also used by the pure-JAX reference).
        self.w1 = jax.random.normal(k1, (3, 3, in_ch, mid_ch), jnp.float32) * 0.1
        self.b1 = jax.random.normal(k2, (mid_ch,), jnp.float32) * 0.01
        self.w2 = jax.random.normal(k3, (3, 3, mid_ch, out_ch), jnp.float32) * 0.1
        self.b2 = jax.random.normal(k4, (out_ch,), jnp.float32) * 0.01
        # Frozen weights -> do the lane-dense layout work once at init.
        self.wb1 = make_banded_weights(self.w1, spatial_w)   # (3, W*Cin, W*C1)
        self.wb2 = make_banded_weights(self.w2, spatial_w)   # (3, W*C1, W*C2)
        self.b1_lane = jnp.tile(self.b1, (spatial_w,)).reshape(1, spatial_w * mid_ch)
        self.b2_lane = jnp.tile(self.b2, (spatial_w,)).reshape(1, spatial_w * out_ch)
        self.perceptual_layers = list(perceptual_layers)

    def forward(self, x_nchw):
        assert x_nchw.shape[3] == self.W, "banded weights precomputed for W"
        h1, h2 = _forward_impl(x_nchw, self.wb1, self.b1_lane,
                               self.wb2, self.b2_lane)
        cache = {"relu1": h1, "relu2": h2}
        return [cache[name] for name in self.perceptual_layers]

    __call__ = forward


def _conv3x3_relu_ref(x_nhwc, w_hwio, bias):
    """Pure-JAX reference (for correctness check only)."""
    y = jax.lax.conv_general_dilated(
        x_nhwc, w_hwio, window_strides=(1, 1), padding="SAME",
        dimension_numbers=("NHWC", "HWIO", "NHWC"))
    return jnp.maximum(y + bias[None, None, None, :], 0.0)


if __name__ == "__main__":
    key = jax.random.PRNGKey(0)
    k_in, k_params = jax.random.split(key)

    N, C, H, W = 2, 4, 16, 16
    x_nchw = jax.random.normal(k_in, (N, C, H, W), jnp.float32)

    model = PerceptualOutputLayerPallas(k_params, in_ch=C, mid_ch=8, out_ch=16,
                                        spatial_w=W)
    outs = model(x_nchw)
    outs = [jax.block_until_ready(o) for o in outs]

    # Verify against a pure-JAX reference of the same backbone.
    x_nhwc = jnp.transpose(x_nchw, (0, 2, 3, 1))
    r1 = _conv3x3_relu_ref(x_nhwc, model.w1, model.b1)
    r2 = _conv3x3_relu_ref(r1, model.w2, model.b2)
    ref = [jnp.transpose(r1, (0, 3, 1, 2)), jnp.transpose(r2, (0, 3, 1, 2))]

    assert len(outs) == 2
    assert outs[0].shape == (N, 8, H, W) and outs[1].shape == (N, 16, H, W)
    for o, r in zip(outs, ref):
        assert jnp.allclose(o, r, atol=1e-4, rtol=1e-4), \
            float(jnp.max(jnp.abs(o - r)))

    print("KERNEL_OK")
</pallas_src>

<mosaic_0001>
module attributes {stable_mosaic.version = 11 : i64} {
  func.func @_fused_backbone_kernel(%arg0: i32, %arg1: memref<1x16x64xf32, #tpu.memory_space<vmem>>, %arg2: memref<3x64x128xf32, #tpu.memory_space<vmem>>, %arg3: memref<1x128xf32, #tpu.memory_space<vmem>>, %arg4: memref<3x128x256xf32, #tpu.memory_space<vmem>>, %arg5: memref<1x256xf32, #tpu.memory_space<vmem>>, %arg6: memref<1x16x128xf32, #tpu.memory_space<vmem>>, %arg7: memref<1x16x256xf32, #tpu.memory_space<vmem>>, %arg8: memref<18x64xf32, #tpu.memory_space<vmem>>, %arg9: memref<18x128xf32, #tpu.memory_space<vmem>>) attributes {dimension_semantics = [#tpu.dimension_semantics<parallel>], iteration_bounds = array<i64: 2>, scalar_prefetch = 0 : i64, scratch_operands = 2 : i64, tpu.core_type = #tpu.core_type<tc>, window_params = [{transform_indices = @transform_0, window_bounds = array<i64: 1, 16, 64>}, {pipeline_mode = #tpu.pipeline_mode<synchronous>, transform_indices = @transform_1, window_bounds = array<i64: 3, 64, 128>}, {pipeline_mode = #tpu.pipeline_mode<synchronous>, transform_indices = @transform_2, window_bounds = array<i64: 1, 128>}, {pipeline_mode = #tpu.pipeline_mode<synchronous>, transform_indices = @transform_3, window_bounds = array<i64: 3, 128, 256>}, {pipeline_mode = #tpu.pipeline_mode<synchronous>, transform_indices = @transform_4, window_bounds = array<i64: 1, 256>}, {transform_indices = @transform_5, window_bounds = array<i64: 1, 16, 128>}, {transform_indices = @transform_6, window_bounds = array<i64: 1, 16, 256>}]} {
    %cst = arith.constant 0.000000e+00 : f32
    %0 = vector.broadcast %cst : f32 to vector<1x64xf32>
    %c0 = arith.constant 0 : index
    %c0_0 = arith.constant 0 : index
    %1 = vector.load %arg8[%c0, %c0_0] : memref<18x64xf32, #tpu.memory_space<vmem>>, vector<1x64xf32>
    tpu.vector_store %arg8[%c0, %c0_0], %0 {strides = array<i32>} : memref<18x64xf32, #tpu.memory_space<vmem>>, vector<1x64xf32>,
    %cst_1 = arith.constant 0.000000e+00 : f32
    %2 = vector.broadcast %cst_1 : f32 to vector<1x64xf32>
    %c17 = arith.constant 17 : index
    %c0_2 = arith.constant 0 : index
    %3 = vector.load %arg8[%c17, %c0_2] : memref<18x64xf32, #tpu.memory_space<vmem>>, vector<1x64xf32>
    tpu.vector_store %arg8[%c17, %c0_2], %2 {strides = array<i32>} : memref<18x64xf32, #tpu.memory_space<vmem>>, vector<1x64xf32>,
    %c0_3 = arith.constant 0 : index
    %c0_4 = arith.constant 0 : index
    %c0_5 = arith.constant 0 : index
    %4 = vector.load %arg1[%c0_3, %c0_4, %c0_5] : memref<1x16x64xf32, #tpu.memory_space<vmem>>, vector<1x16x64xf32>
    %5 = vector.shape_cast %4 : vector<1x16x64xf32> to vector<16x64xf32>
    %c1 = arith.constant 1 : index
    %c0_6 = arith.constant 0 : index
    %6 = vector.load %arg8[%c1, %c0_6] : memref<18x64xf32, #tpu.memory_space<vmem>>, vector<16x64xf32>
    tpu.vector_store %arg8[%c1, %c0_6], %5 {strides = array<i32>} : memref<18x64xf32, #tpu.memory_space<vmem>>, vector<16x64xf32>,
    %c0_7 = arith.constant 0 : index
    %c0_8 = arith.constant 0 : index
    %7 = vector.load %arg8[%c0_7, %c0_8] : memref<18x64xf32, #tpu.memory_space<vmem>>, vector<16x64xf32>
    %c0_9 = arith.constant 0 : index
    %c0_10 = arith.constant 0 : index
    %c0_11 = arith.constant 0 : index
    %8 = vector.load %arg2[%c0_9, %c0_10, %c0_11] : memref<3x64x128xf32, #tpu.memory_space<vmem>>, vector<1x64x128xf32>
    %9 = vector.shape_cast %8 : vector<1x64x128xf32> to vector<64x128xf32>
    %cst_12 = arith.constant dense<0.000000e+00> : vector<16x128xf32>
    %10 = tpu.matmul %7, %9, %cst_12 {dimension_numbers = #tpu.dot_dimension_numbers<[1], [0], [0], [1], [0, 0, 1, 1], [], []>} : vector<16x64xf32>, vector<64x128xf32>, vector<16x128xf32> -> vector<16x128xf32>
    %c1_13 = arith.constant 1 : index
    %c0_14 = arith.constant 0 : index
    %11 = vector.load %arg8[%c1_13, %c0_14] : memref<18x64xf32, #tpu.memory_space<vmem>>, vector<16x64xf32>
    %c1_15 = arith.constant 1 : index
    %c0_16 = arith.constant 0 : index
    %c0_17 = arith.constant 0 : index
    %12 = vector.load %arg2[%c1_15, %c0_16, %c0_17] : memref<3x64x128xf32, #tpu.memory_space<vmem>>, vector<1x64x128xf32>
    %13 = vector.shape_cast %12 : vector<1x64x128xf32> to vector<64x128xf32>
    %cst_18 = arith.constant dense<0.000000e+00> : vector<16x128xf32>
    %14 = tpu.matmul %11, %13, %cst_18 {dimension_numbers = #tpu.dot_dimension_numbers<[1], [0], [0], [1], [0, 0, 1, 1], [], []>} : vector<16x64xf32>, vector<64x128xf32>, vector<16x128xf32> -> vector<16x128xf32>
    %15 = arith.addf %10, %14 : vector<16x128xf32>
    %c2 = arith.constant 2 : index
    %c0_19 = arith.constant 0 : index
    %16 = vector.load %arg8[%c2, %c0_19] : memref<18x64xf32, #tpu.memory_space<vmem>>, vector<16x64xf32>
    %c2_20 = arith.constant 2 : index
    %c0_21 = arith.constant 0 : index
    %c0_22 = arith.constant 0 : index
    %17 = vector.load %arg2[%c2_20, %c0_21, %c0_22] : memref<3x64x128xf32, #tpu.memory_space<vmem>>, vector<1x64x128xf32>
    %18 = vector.shape_cast %17 : vector<1x64x128xf32> to vector<64x128xf32>
    %cst_23 = arith.constant dense<0.000000e+00> : vector<16x128xf32>
    %19 = tpu.matmul %16, %18, %cst_23 {dimension_numbers = #tpu.dot_dimension_numbers<[1], [0], [0], [1], [0, 0, 1, 1], [], []>} : vector<16x64xf32>, vector<64x128xf32>, vector<16x128xf32> -> vector<16x128xf32>
    %20 = arith.addf %15, %19 : vector<16x128xf32>
    %c0_24 = arith.constant 0 : index
    %c0_25 = arith.constant 0 : index
    %21 = vector.load %arg3[%c0_24, %c0_25] : memref<1x128xf32, #tpu.memory_space<vmem>>, vector<1x128xf32>
    %22 = vector.broadcast %21 : vector<1x128xf32> to vector<16x128xf32>
    %23 = arith.addf %20, %22 : vector<16x128xf32>
    %cst_26 = arith.constant 0.000000e+00 : f32
    %24 = vector.broadcast %cst_26 : f32 to vector<16x128xf32>
    %25 = arith.maximumf %23, %24 : vector<16x128xf32>
    %c0_27 = arith.constant 0 : index
    %c0_28 = arith.constant 0 : index
    %c0_29 = arith.constant 0 : index
    %26 = vector.load %arg6[%c0_27, %c0_28, %c0_29] : memref<1x16x128xf32, #tpu.memory_space<vmem>>, vector<1x16x128xf32>
    %27 = vector.shape_cast %26 : vector<1x16x128xf32> to vector<16x128xf32>
    %28 = vector.shape_cast %25 : vector<16x128xf32> to vector<1x16x128xf32>
    tpu.vector_store %arg6[%c0_27, %c0_28, %c0_29], %28 {strides = array<i32>} : memref<1x16x128xf32, #tpu.memory_space<vmem>>, vector<1x16x128xf32>,
    %cst_30 = arith.constant 0.000000e+00 : f32
    %29 = vector.broadcast %cst_30 : f32 to vector<1x128xf32>
    %c0_31 = arith.constant 0 : index
    %c0_32 = arith.constant 0 : index
    %30 = vector.load %arg9[%c0_31, %c0_32] : memref<18x128xf32, #tpu.memory_space<vmem>>, vector<1x128xf32>
    tpu.vector_store %arg9[%c0_31, %c0_32], %29 {strides = array<i32>} : memref<18x128xf32, #tpu.memory_space<vmem>>, vector<1x128xf32>,
    %cst_33 = arith.constant 0.000000e+00 : f32
    %31 = vector.broadcast %cst_33 : f32 to vector<1x128xf32>
    %c17_34 = arith.constant 17 : index
    %c0_35 = arith.constant 0 : index
    %32 = vector.load %arg9[%c17_34, %c0_35] : memref<18x128xf32, #tpu.memory_space<vmem>>, vector<1x128xf32>
    tpu.vector_store %arg9[%c17_34, %c0_35], %31 {strides = array<i32>} : memref<18x128xf32, #tpu.memory_space<vmem>>, vector<1x128xf32>,
    %c1_36 = arith.constant 1 : index
    %c0_37 = arith.constant 0 : index
    %33 = vector.load %arg9[%c1_36, %c0_37] : memref<18x128xf32, #tpu.memory_space<vmem>>, vector<16x128xf32>
    tpu.vector_store %arg9[%c1_36, %c0_37], %25 {strides = array<i32>} : memref<18x128xf32, #tpu.memory_space<vmem>>, vector<16x128xf32>,
    %c0_38 = arith.constant 0 : index
    %c0_39 = arith.constant 0 : index
    %34 = vector.load %arg9[%c0_38, %c0_39] : memref<18x128xf32, #tpu.memory_space<vmem>>, vector<16x128xf32>
    %c0_40 = arith.constant 0 : index
    %c0_41 = arith.constant 0 : index
    %c0_42 = arith.constant 0 : index
    %35 = vector.load %arg4[%c0_40, %c0_41, %c0_42] : memref<3x128x256xf32, #tpu.memory_space<vmem>>, vector<1x128x256xf32>
    %36 = vector.shape_cast %35 : vector<1x128x256xf32> to vector<128x256xf32>
    %cst_43 = arith.constant dense<0.000000e+00> : vector<16x256xf32>
    %37 = tpu.matmul %34, %36, %cst_43 {dimension_numbers = #tpu.dot_dimension_numbers<[1], [0], [0], [1], [0, 0, 1, 1], [], []>} : vector<16x128xf32>, vector<128x256xf32>, vector<16x256xf32> -> vector<16x256xf32>
    %c1_44 = arith.constant 1 : index
    %c0_45 = arith.constant 0 : index
    %38 = vector.load %arg9[%c1_44, %c0_45] : memref<18x128xf32, #tpu.memory_space<vmem>>, vector<16x128xf32>
    %c1_46 = arith.constant 1 : index
    %c0_47 = arith.constant 0 : index
    %c0_48 = arith.constant 0 : index
    %39 = vector.load %arg4[%c1_46, %c0_47, %c0_48] : memref<3x128x256xf32, #tpu.memory_space<vmem>>, vector<1x128x256xf32>
    %40 = vector.shape_cast %39 : vector<1x128x256xf32> to vector<128x256xf32>
    %cst_49 = arith.constant dense<0.000000e+00> : vector<16x256xf32>
    %41 = tpu.matmul %38, %40, %cst_49 {dimension_numbers = #tpu.dot_dimension_numbers<[1], [0], [0], [1], [0, 0, 1, 1], [], []>} : vector<16x128xf32>, vector<128x256xf32>, vector<16x256xf32> -> vector<16x256xf32>
    %42 = arith.addf %37, %41 : vector<16x256xf32>
    %c2_50 = arith.constant 2 : index
    %c0_51 = arith.constant 0 : index
    %43 = vector.load %arg9[%c2_50, %c0_51] : memref<18x128xf32, #tpu.memory_space<vmem>>, vector<16x128xf32>
    %c2_52 = arith.constant 2 : index
    %c0_53 = arith.constant 0 : index
    %c0_54 = arith.constant 0 : index
    %44 = vector.load %arg4[%c2_52, %c0_53, %c0_54] : memref<3x128x256xf32, #tpu.memory_space<vmem>>, vector<1x128x256xf32>
    %45 = vector.shape_cast %44 : vector<1x128x256xf32> to vector<128x256xf32>
    %cst_55 = arith.constant dense<0.000000e+00> : vector<16x256xf32>
    %46 = tpu.matmul %43, %45, %cst_55 {dimension_numbers = #tpu.dot_dimension_numbers<[1], [0], [0], [1], [0, 0, 1, 1], [], []>} : vector<16x128xf32>, vector<128x256xf32>, vector<16x256xf32> -> vector<16x256xf32>
    %47 = arith.addf %42, %46 : vector<16x256xf32>
    %c0_56 = arith.constant 0 : index
    %c0_57 = arith.constant 0 : index
    %48 = vector.load %arg5[%c0_56, %c0_57] : memref<1x256xf32, #tpu.memory_space<vmem>>, vector<1x256xf32>
    %49 = vector.broadcast %48 : vector<1x256xf32> to vector<16x256xf32>
    %50 = arith.addf %47, %49 : vector<16x256xf32>
    %cst_58 = arith.constant 0.000000e+00 : f32
    %51 = vector.broadcast %cst_58 : f32 to vector<16x256xf32>
    %52 = arith.maximumf %50, %51 : vector<16x256xf32>
    %c0_59 = arith.constant 0 : index
    %c0_60 = arith.constant 0 : index
    %c0_61 = arith.constant 0 : index
    %53 = vector.load %arg7[%c0_59, %c0_60, %c0_61] : memref<1x16x256xf32, #tpu.memory_space<vmem>>, vector<1x16x256xf32>
    %54 = vector.shape_cast %53 : vector<1x16x256xf32> to vector<16x256xf32>
    %55 = vector.shape_cast %52 : vector<16x256xf32> to vector<1x16x256xf32>
    tpu.vector_store %arg7[%c0_59, %c0_60, %c0_61], %55 {strides = array<i32>} : memref<1x16x256xf32, #tpu.memory_space<vmem>>, vector<1x16x256xf32>,
    return
  }
  func.func @transform_0(%arg0: i32) -> (i32, i32, i32) {
    %c0_i32 = arith.constant 0 : i32
    %c0_i32_0 = arith.constant 0 : i32
    %c0_i32_1 = arith.constant 0 : i32
    return %arg0, %c0_i32, %c0_i32_0 : i32, i32, i32
  }
  func.func @transform_1(%arg0: i32) -> (i32, i32, i32) {
    %c0_i32 = arith.constant 0 : i32
    %c0_i32_0 = arith.constant 0 : i32
    %c0_i32_1 = arith.constant 0 : i32
    %c0_i32_2 = arith.constant 0 : i32
    return %c0_i32, %c0_i32_0, %c0_i32_1 : i32, i32, i32
  }
  func.func @transform_2(%arg0: i32) -> (i32, i32) {
    %c0_i32 = arith.constant 0 : i32
    %c0_i32_0 = arith.constant 0 : i32
    %c0_i32_1 = arith.constant 0 : i32
    return %c0_i32, %c0_i32_0 : i32, i32
  }
  func.func @transform_3(%arg0: i32) -> (i32, i32, i32) {
    %c0_i32 = arith.constant 0 : i32
    %c0_i32_0 = arith.constant 0 : i32
    %c0_i32_1 = arith.constant 0 : i32
    %c0_i32_2 = arith.constant 0 : i32
    return %c0_i32, %c0_i32_0, %c0_i32_1 : i32, i32, i32
  }
  func.func @transform_4(%arg0: i32) -> (i32, i32) {
    %c0_i32 = arith.constant 0 : i32
    %c0_i32_0 = arith.constant 0 : i32
    %c0_i32_1 = arith.constant 0 : i32
    return %c0_i32, %c0_i32_0 : i32, i32
  }
  func.func @transform_5(%arg0: i32) -> (i32, i32, i32) {
    %c0_i32 = arith.constant 0 : i32
    %c0_i32_0 = arith.constant 0 : i32
    %c0_i32_1 = arith.constant 0 : i32
    return %arg0, %c0_i32, %c0_i32_0 : i32, i32, i32
  }
  func.func @transform_6(%arg0: i32) -> (i32, i32, i32) {
    %c0_i32 = arith.constant 0 : i32
    %c0_i32_0 = arith.constant 0 : i32
    %c0_i32_1 = arith.constant 0 : i32
    return %arg0, %c0_i32, %c0_i32_0 : i32, i32, i32
  }
}

</mosaic_0001>

<llo_original>
// kernel: _forward_impl.1
$region0: #{_forward_impl.1}
  #allocation0 [shape = 'u32[]', space=smem, size = 0x4, offset = 0x4, fixed_abs, tag = 'smem constant byte address 0x4 - core index']
  #allocation1 [shape = 'u32[144,128]{1,0:T(1,128)}', space=vmem, size = 0x12000, scoped, tag = 'internal scratch']
  #allocation2 [shape = 'f32[18,64]{1,0:T(8,128)}', space=vmem, size = 0x3000, scoped, tag = 'scratch operand']
  #allocation3 [shape = 'f32[18,128]{1,0:T(8,128)}', space=vmem, size = 0x3000, scoped, tag = 'scratch operand']
  %s0 = inlined_call_operand.vmem [shape: f32[2,16,64], index: 0, kind: input, shape index: {}]
  %s1 = inlined_call_operand.vmem [shape: f32[3,64,128], index: 1, kind: input, shape index: {}]
  %s2 = inlined_call_operand.vmem [shape: f32[1,128], index: 2, kind: input, shape index: {}]
  %s3 = inlined_call_operand.hbm [shape: f32[3,128,256], index: 3, kind: input, shape index: {}]
  %s4 = inlined_call_operand.vmem [shape: f32[1,256], index: 4, kind: input, shape index: {}]
  %s5 = inlined_call_operand.vmem [shape: f32[2,16,128], index: 5, kind: output, shape index: {0}]
  %s6 = inlined_call_operand.vmem [shape: f32[2,16,256], index: 6, kind: output, shape index: {1}]
  %7 = xla_tuple %s5, %s6
  %s8 = sld [smem:[#allocation0]]
  $region65: #{_forward_impl.1} parent=0
    _
  %s10 = ssub.s32 1, %s8
  %s11 = scalar_select 0, %s10, %s8
  $region1: #{_forward_impl.1} parent=0
    #allocation4 [shape = 'u8[393216]{0}', space=vmem, size = 0x60000, scoped, tag = 'input window, operand 3, single buffered']
    #allocation5 [shape = 's32[2]{0}', space=sflag, size = 0x8, scoped, tag = 'scoped memory for _forward_impl.1']
    %12 = vsyncpa [#allocation5], 0
    loop: start=0, step=1, limit=4
    $region2: #{_forward_impl.1} parent=1 // loop_pre_header
      _
    $region3: #{_forward_impl.1} parent=1 // loop_header
      %s14 = sphi 0, %s18
      %p15 = scmp.ge.s32.totalorder %s14, 4
      %s24 = sphi 0, %s26
      %s27 = sphi 0, %s24
      %s28 = sphi 0, %s27
      %s44 = sphi 0, %s28
      %s48 = sphi 0, %s48
      %s50 = sphi 0, %s48
      %s51 = sphi 0, %s50
      %s65 = sphi 0, %s51
      %s69 = sphi 0, %s69
      %s71 = sphi 0, %s69
      %s72 = sphi 0, %s71
      %s86 = sphi 0, %s72
      %s90 = sphi 0, %s90
      %s92 = sphi 0, %s90
      %s93 = sphi 0, %s92
      %s107 = sphi 0, %s93
      %s111 = sphi 0, %s111
      %s113 = sphi 0, %s111
      %s114 = sphi 0, %s113
      %s128 = sphi 0, %s114
      %s134 = sphi 0, %s136
      %s137 = sphi 0, %s134
      %s138 = sphi 0, %s137
      %s154 = sphi 0, %s138
      %s160 = sphi 0, %s162
      %s163 = sphi 0, %s160
      %s164 = sphi 0, %s163
      %s180 = sphi 0, %s164
    $region4: #{_forward_impl.1} parent=1 // loop_header_branch
      %17 = sbr.rel (%p15) target = $region8
    $region5: #{_forward_impl.1} parent=1 // loop_body
      %s19 = ssub.s32 %s14, 1
      %s20 = ssub.s32 %s14, 2
      %s21 = sadd.s32 %s14, 1
      %s22 = ssub.s32 %s14, %s21
      %p23 = scmp.eq.s32.totalorder %s22, 0
      %s25 = sadd.s32 %s24, 1
      %s26 = scalar_select %p23, %s24, %s25
      %p29 = pneg %p23
      %p30 = scmp.eq.s32.totalorder %s14, 1
      %p31 = por %p29, %p30
      %p32 = scmp.ne.s32.totalorder %s24, %s27
      %p33 = scmp.eq.s32.totalorder %s14, 0
      %p34 = por %p32, %p33
      %p35 = scmp.ne.s32.totalorder %s24, %s27
      %p36 = scmp.eq.s32.totalorder %s19, 1
      %p37 = por %p35, %p36
      %p38 = scmp.ne.s32.totalorder %s27, %s28
      %p39 = scmp.eq.s32.totalorder %s19, 0
      %p40 = por %p38, %p39
      %p41 = scmp.ne.s32.totalorder %s27, %s28
      %p42 = scmp.eq.s32.totalorder %s20, 1
      %p43 = por %p41, %p42
      %p45 = scmp.ne.s32.totalorder %s28, %s44
      %p46 = scmp.eq.s32.totalorder %s20, 0
      %p47 = por %p45, %p46
      %s49 = sadd.s32 %s48, 1
      %p52 = scmp.eq.s32.totalorder %s14, 1
      %p53 = scmp.ne.s32.totalorder %s48, %s50
      %p54 = scmp.eq.s32.totalorder %s14, 0
      %p55 = por %p53, %p54
      %p56 = scmp.ne.s32.totalorder %s48, %s50
      %p57 = scmp.eq.s32.totalorder %s19, 1
      %p58 = por %p56, %p57
      %p59 = scmp.ne.s32.totalorder %s50, %s51
      %p60 = scmp.eq.s32.totalorder %s19, 0
      %p61 = por %p59, %p60
      %p62 = scmp.ne.s32.totalorder %s50, %s51
      %p63 = scmp.eq.s32.totalorder %s20, 1
      %p64 = por %p62, %p63
      %p66 = scmp.ne.s32.totalorder %s51, %s65
      %p67 = scmp.eq.s32.totalorder %s20, 0
      %p68 = por %p66, %p67
      %s70 = sadd.s32 %s69, 1
      %p73 = scmp.eq.s32.totalorder %s14, 1
      %p74 = scmp.ne.s32.totalorder %s69, %s71
      %p75 = scmp.eq.s32.totalorder %s14, 0
      %p76 = por %p74, %p75
      %p77 = scmp.ne.s32.totalorder %s69, %s71
      %p78 = scmp.eq.s32.totalorder %s19, 1
      %p79 = por %p77, %p78
      %p80 = scmp.ne.s32.totalorder %s71, %s72
      %p81 = scmp.eq.s32.totalorder %s19, 0
      %p82 = por %p80, %p81
      %p83 = scmp.ne.s32.totalorder %s71, %s72
      %p84 = scmp.eq.s32.totalorder %s20, 1
      %p85 = por %p83, %p84
      %p87 = scmp.ne.s32.totalorder %s72, %s86
      %p88 = scmp.eq.s32.totalorder %s20, 0
      %p89 = por %p87, %p88
      %s91 = sadd.s32 %s90, 1
      %p94 = scmp.eq.s32.totalorder %s14, 1
      %p95 = scmp.ne.s32.totalorder %s90, %s92
      %p96 = scmp.eq.s32.totalorder %s14, 0
      %p97 = por %p95, %p96
      %p98 = scmp.ne.s32.totalorder %s90, %s92
      %p99 = scmp.eq.s32.totalorder %s19, 1
      %p100 = por %p98, %p99
      %p101 = scmp.ne.s32.totalorder %s92, %s93
      %p102 = scmp.eq.s32.totalorder %s19, 0
      %p103 = por %p101, %p102
      %p104 = scmp.ne.s32.totalorder %s92, %s93
      %p105 = scmp.eq.s32.totalorder %s20, 1
      %p106 = por %p104, %p105
      %p108 = scmp.ne.s32.totalorder %s93, %s107
      %p109 = scmp.eq.s32.totalorder %s20, 0
      %p110 = por %p108, %p109
      %s112 = sadd.s32 %s111, 1
      %p115 = scmp.eq.s32.totalorder %s14, 1
      %p116 = scmp.ne.s32.totalorder %s111, %s113
      %p117 = scmp.eq.s32.totalorder %s14, 0
      %p118 = por %p116, %p117
      %p119 = scmp.ne.s32.totalorder %s111, %s113
      %p120 = scmp.eq.s32.totalorder %s19, 1
      %p121 = por %p119, %p120
      %p122 = scmp.ne.s32.totalorder %s113, %s114
      %p123 = scmp.eq.s32.totalorder %s19, 0
      %p124 = por %p122, %p123
      %p125 = scmp.ne.s32.totalorder %s113, %s114
      %p126 = scmp.eq.s32.totalorder %s20, 1
      %p127 = por %p125, %p126
      %p129 = scmp.ne.s32.totalorder %s114, %s128
      %p130 = scmp.eq.s32.totalorder %s20, 0
      %p131 = por %p129, %p130
      %s132 = ssub.s32 %s14, %s21
      %p133 = scmp.eq.s32.totalorder %s132, 0
      %s135 = sadd.s32 %s134, 1
      %s136 = scalar_select %p133, %s134, %s135
      %p139 = pneg %p133
      %p140 = scmp.eq.s32.totalorder %s14, 1
      %p141 = por %p139, %p140
      %p142 = scmp.ne.s32.totalorder %s134, %s137
      %p143 = scmp.eq.s32.totalorder %s14, 0
      %p144 = por %p142, %p143
      %p145 = scmp.ne.s32.totalorder %s134, %s137
      %p146 = scmp.eq.s32.totalorder %s19, 1
      %p147 = por %p145, %p146
      %p148 = scmp.ne.s32.totalorder %s137, %s138
      %p149 = scmp.eq.s32.totalorder %s19, 0
      %p150 = por %p148, %p149
      %p151 = scmp.ne.s32.totalorder %s137, %s138
      %p152 = scmp.eq.s32.totalorder %s20, 1
      %p153 = por %p151, %p152
      %p155 = scmp.ne.s32.totalorder %s138, %s154
      %p156 = scmp.eq.s32.totalorder %s20, 0
      %p157 = por %p155, %p156
      %s158 = ssub.s32 %s14, %s21
      %p159 = scmp.eq.s32.totalorder %s158, 0
      %s161 = sadd.s32 %s160, 1
      %s162 = scalar_select %p159, %s160, %s161
      %p165 = pneg %p159
      %p166 = scmp.eq.s32.totalorder %s14, 1
      %p167 = por %p165, %p166
      %p168 = scmp.ne.s32.totalorder %s160, %s163
      %p169 = scmp.eq.s32.totalorder %s14, 0
      %p170 = por %p168, %p169
      %p171 = scmp.ne.s32.totalorder %s160, %s163
      %p172 = scmp.eq.s32.totalorder %s19, 1
      %p173 = por %p171, %p172
      %p174 = scmp.ne.s32.totalorder %s163, %s164
      %p175 = scmp.eq.s32.totalorder %s19, 0
      %p176 = por %p174, %p175
      %p177 = scmp.ne.s32.totalorder %s163, %s164
      %p178 = scmp.eq.s32.totalorder %s20, 1
      %p179 = por %p177, %p178
      %p181 = scmp.ne.s32.totalorder %s164, %s180
      %p182 = scmp.eq.s32.totalorder %s20, 0
      %p183 = por %p181, %p182
      %p184 = scmp.le.s32.totalorder 1, %s14
      %p185 = scmp.lt.s32.totalorder %s14, 3
      %p186 = pnand %p184, %p185
      %p187 = pneg %p186
      // Predicated region
      $region9: #{_forward_impl.1} parent=5 // pred_check
        _
      $region10: #{_forward_impl.1} parent=5 // pred_check_branch
        %189 = sbr.rel (%p186) target = $region12
      $region11: #{_forward_impl.1} parent=5 // pred_region
        %s190 = ssub.s32 %s14, 1
        // Predicated region
        $region13: #{_forward_impl.1} parent=11 // pred_check
          %p191 = pneg %p61
        $region14: #{_forward_impl.1} parent=11 // pred_check_branch
          %193 = sbr.rel (%p191) target = $region16
        $region15: #{_forward_impl.1} parent=11 // pred_region
          _
        $region16: #{_forward_impl.1} parent=11 // pred_fallthru
          _
        // Predicated region
        $region17: #{_forward_impl.1} parent=11 // pred_check
          %p194 = pneg %p82
        $region18: #{_forward_impl.1} parent=11 // pred_check_branch
          %196 = sbr.rel (%p194) target = $region20
        $region19: #{_forward_impl.1} parent=11 // pred_region
          _
        $region20: #{_forward_impl.1} parent=11 // pred_fallthru
          _
        // Predicated region
        $region21: #{_forward_impl.1} parent=11 // pred_check
          %p197 = pneg %p103
        $region22: #{_forward_impl.1} parent=11 // pred_check_branch
          %199 = sbr.rel (%p197) target = $region24
        $region23: #{_forward_impl.1} parent=11 // pred_region
          %s201 = ssub.s32 12288, 12288
          %202 = vsyncadd [#allocation5], %s201
          %s203 = sshll.u32 [#allocation4], 4
          %s204 = int_to_ptr.vmem [resolvable:$true] %s203
          %209 = dma.hbm_to_vmem [thread:$0]  %s3, 12288, %s204, [#allocation5], 256, 256, 16
        $region24: #{_forward_impl.1} parent=11 // pred_fallthru
          _
        // Predicated region
        $region25: #{_forward_impl.1} parent=11 // pred_check
          %p210 = pneg %p124
        $region26: #{_forward_impl.1} parent=11 // pred_check_branch
          %212 = sbr.rel (%p210) target = $region28
        $region27: #{_forward_impl.1} parent=11 // pred_region
          _
        $region28: #{_forward_impl.1} parent=11 // pred_fallthru
          _
      $region12: #{_forward_impl.1} parent=5 // pred_fallthru
        _
      %p213 = scmp.lt.s32.totalorder %s14, 2
      // Predicated region
      $region29: #{_forward_impl.1} parent=5 // pred_check
        %p214 = pneg %p213
      $region30: #{_forward_impl.1} parent=5 // pred_check_branch
        %216 = sbr.rel (%p214) target = $region32
      $region31: #{_forward_impl.1} parent=5 // pred_region
        // Predicated region
        $region33: #{_forward_impl.1} parent=31 // pred_check
          %p217 = pneg %p34
        $region34: #{_forward_impl.1} parent=31 // pred_check_branch
          %219 = sbr.rel (%p217) target = $region36
        $region35: #{_forward_impl.1} parent=31 // pred_region
          %p220 = scmp.lt.s32.totalorder %s14, 1
          %s221 = scalar_select %p220, %s14, 1
          %s222 = smul.addr %s221, 2
          %s223 = smul.addr %s222, 8
          %s224 = scalar_lea.vmem %s0, %s223
        $region36: #{_forward_impl.1} parent=31 // pred_fallthru
          _
      $region32: #{_forward_impl.1} parent=5 // pred_fallthru
        _
      %p225 = scmp.le.s32.totalorder 1, %s14
      %p226 = scmp.lt.s32.totalorder %s14, 3
      %p227 = pnand %p225, %p226
      %p228 = pneg %p227
      // Predicated region
      $region37: #{_forward_impl.1} parent=5 // pred_check
        _
      $region38: #{_forward_impl.1} parent=5 // pred_check_branch
        %230 = sbr.rel (%p227) target = $region40
      $region39: #{_forward_impl.1} parent=5 // pred_region
        %s231 = ssub.s32 %s14, 1
        // Predicated region
        $region41: #{_forward_impl.1} parent=39 // pred_check
          %p232 = pneg %p103
        $region42: #{_forward_impl.1} parent=39 // pred_check_branch
          %234 = sbr.rel (%p232) target = $region44
        $region43: #{_forward_impl.1} parent=39 // pred_region
          %235 = dma.done [#allocation5], 12288
        $region44: #{_forward_impl.1} parent=39 // pred_fallthru
          _
        %p236 = scmp.lt.s32.totalorder %s19, 1
        %s237 = scalar_select %p236, %s19, 1
        %s238 = smul.addr %s237, 2
        %s239 = smul.addr %s238, 8
        %s240 = scalar_lea.vmem %s0, %s239
        %p241 = pneg %p40
        %p242 = pneg %p37
        %p243 = pneg %p61
        %p244 = pneg %p58
        %p245 = pneg %p82
        %p246 = pneg %p79
        %p247 = pneg %p103
        %p248 = pneg %p100
        %p249 = pneg %p124
        %p250 = pneg %p121
        %p251 = pneg %p150
        %p252 = pneg %p147
        %p253 = scmp.lt.s32.totalorder %s19, 1
        %s254 = scalar_select %p253, %s19, 1
        %s255 = smul.addr %s254, 2
        %s256 = smul.addr %s255, 8
        %s257 = scalar_lea.vmem %s5, %s256
        %p258 = pneg %p176
        %p259 = pneg %p173
        %p260 = scmp.lt.s32.totalorder %s19, 1
        %s261 = scalar_select %p260, %s19, 1
        %s262 = smul.addr %s261, 4
        %s263 = smul.addr %s262, 8
        %s264 = scalar_lea.vmem %s6, %s263
        %p265 = scmp.lt.s32.totalorder %s19, 1
        %s266 = scalar_select %p265, %s19, 1
        %s267 = smul.addr %s266, 2
        %s268 = smul.addr %s267, 8
        %s269 = scalar_lea.vmem %s0, %s268
        %p270 = scmp.lt.s32.totalorder %s19, 1
        %s271 = scalar_select %p270, %s19, 1
        %s272 = smul.addr %s271, 2
        %s273 = smul.addr %s272, 8
        %s274 = scalar_lea.vmem %s5, %s273
        %p275 = scmp.lt.s32.totalorder %s19, 1
        %s276 = scalar_select %p275, %s19, 1
        %s277 = smul.addr %s276, 4
        %s278 = smul.addr %s277, 8
        %s279 = scalar_lea.vmem %s6, %s278
        %vm280 = vcmask 516096
        %281 = vst.msk [vmem:[#allocation2] sm:$0x1] %vm280, 0.0
        %282 = vst.msk [vmem:[#allocation2 + $0x11] sm:$0x1] %vm280, 0.0
        %v283 = vld [vmem:[%s269] sm:$0xff]
        %v284 = vld [vmem:[%s269 + $0x8] sm:$0xff]
        %vm285 = vcmask 523264
        %286 = vst.msk [vmem:[#allocation2 + $0x1] sm:$0xff] %vm285, %v283
        %287 = vst.msk [vmem:[#allocation2 + $0x9] sm:$0xff] %vm285, %v284
        %v288 = vld [vmem:[#allocation2] sm:$0xff]
        %v289 = vld [vmem:[#allocation2 + $0x8] sm:$0xff]
        %v290 = vld [vmem:[%s1] sm:$0xff]
        %v291 = vld [vmem:[%s1 + $0x8] sm:$0xff]
        %v292 = vld [vmem:[%s1 + $0x10] sm:$0xff]
        %v293 = vld [vmem:[%s1 + $0x18] sm:$0xff]
        %v294 = vld [vmem:[%s1 + $0x20] sm:$0xff]
        %v295 = vld [vmem:[%s1 + $0x28] sm:$0xff]
        %v296 = vld [vmem:[%s1 + $0x30] sm:$0xff]
        %v297 = vld [vmem:[%s1 + $0x38] sm:$0xff]
        %v298 = vld [vmem:[#allocation2 + $0x1] sm:$0xff]
        %v299 = vld [vmem:[#allocation2 + $0x9] sm:$0xff]
        %s300 = scalar_lea.vmem %s1, 64
        %v301 = vld [vmem:[%s300] sm:$0xff]
        %v302 = vld [vmem:[%s300 + $0x8] sm:$0xff]
        %v303 = vld [vmem:[%s300 + $0x10] sm:$0xff]
        %v304 = vld [vmem:[%s300 + $0x18] sm:$0xff]
        %v305 = vld [vmem:[%s300 + $0x20] sm:$0xff]
        %v306 = vld [vmem:[%s300 + $0x28] sm:$0xff]
        %v307 = vld [vmem:[%s300 + $0x30] sm:$0xff]
        %v308 = vld [vmem:[%s300 + $0x38] sm:$0xff]
        %v310 = vsel %vm285, %v298, 0
        %v313 = vsel %vm285, %v299, 0
        %315 = vmatprep.subr.mxu0 0.0
        %316 = vmatpush1.msra.mxu0 0.0
        %317 = vmatprep.subr.mxu0 0.0
        %318 = vmatpush1.msra.mxu0 0.0
        %319 = vmatprep.subr.mxu0 0.0
        %320 = vmatpush1.msra.mxu0 0.0
        %321 = vmatprep.subr.mxu0 0.0
        %322 = vmatpush1.msra.mxu0 0.0
        %323 = vmatprep.subr.mxu0 0.0
        %324 = vmatpush1.msra.mxu0 0.0
        %325 = vmatprep.subr.mxu0 0.0
        %326 = vmatpush1.msra.mxu0 0.0
        %327 = vmatprep.subr.mxu0 0.0
        %328 = vmatpush1.msra.mxu0 0.0
        %329 = vmatprep.subr.mxu0 0.0
        %330 = vmatpush1.msra.mxu0 0.0
        %331 = vmatprep.subr.mxu0 0.0
        %332 = vmatpush1.msra.mxu0 %v308
        %333 = vmatprep.subr.mxu0 0.0
        %334 = vmatpush1.msra.mxu0 %v307
        %335 = vmatprep.subr.mxu0 0.0
        %336 = vmatpush1.msra.mxu0 %v306
        %337 = vmatprep.subr.mxu0 0.0
        %338 = vmatpush1.msra.mxu0 %v305
        %339 = vmatprep.subr.mxu0 0.0
        %340 = vmatpush1.msra.mxu0 %v304
        %341 = vmatprep.subr.mxu0 0.0
        %342 = vmatpush1.msra.mxu0 %v303
        %343 = vmatprep.subr.mxu0 0.0
        %344 = vmatpush1.msra.mxu0 %v302
        %345 = vmatprep.subr.mxu0 0.0
        %346 = vmatpush1.msra.mxu0 %v301
        %347 = vmatprep.subr.mxu0 0.0
        %348 = vmatpush2.msra.mxu0 0.0
        %349 = vmatprep.subr.mxu0 0.0
        %350 = vmatpush2.msra.mxu0 0.0
        %351 = vmatprep.subr.mxu0 0.0
        %352 = vmatpush2.msra.mxu0 0.0
        %353 = vmatprep.subr.mxu0 0.0
        %354 = vmatpush2.msra.mxu0 0.0
        %355 = vmatprep.subr.mxu0 0.0
        %356 = vmatpush2.msra.mxu0 0.0
        %357 = vmatprep.subr.mxu0 0.0
        %358 = vmatpush2.msra.mxu0 0.0
        %359 = vmatprep.subr.mxu0 0.0
        %360 = vmatpush2.msra.mxu0 0.0
        %361 = vmatprep.subr.mxu0 0.0
        %362 = vmatpush2.msra.mxu0 0.0
        %363 = vmatprep.subr.mxu0 0.0
        %364 = vmatpush2.msra.mxu0 0.0
        %365 = vmatprep.subr.mxu0 0.0
        %366 = vmatpush2.msra.mxu0 0.0
        %367 = vmatprep.subr.mxu0 0.0
        %368 = vmatpush2.msra.mxu0 0.0
        %369 = vmatprep.subr.mxu0 0.0
        %370 = vmatpush2.msra.mxu0 0.0
        %371 = vmatprep.subr.mxu0 0.0
        %372 = vmatpush2.msra.mxu0 0.0
        %373 = vmatprep.subr.mxu0 0.0
        %374 = vmatpush2.msra.mxu0 0.0
        %375 = vmatprep.subr.mxu0 0.0
        %376 = vmatpush2.msra.mxu0 0.0
        %377 = vmatprep.subr.mxu0 0.0
        %378 = vmatpush2.msra.mxu0 0.0
        %379 = vmatprep.mubr.f32.mxu0 0.0
        %380 = vmatmul.mubr.f32.gmra.mxu0 %v310
        %v381 = vpop.f32.mrf.mxu0
        %v382 = vadd.f32 0.0, %v381
        %v383 = vpop.f32.mrf.mxu0
        %384 = vmatprep.mubr.f32.mxu0 0.0
        %385 = vmatmul.mubr.f32.gmra.mxu0 %v313
        %v386 = vpop.f32.mrf.mxu0
        %v387 = vadd.f32 0.0, %v386
        %v388 = vpop.f32.mrf.mxu0
        %389 = vdwg.mxu0
        %v391 = vsel %vm285, %v288, 0
        %v394 = vsel %vm285, %v289, 0
        %396 = vmatprep.subr.mxu0 0.0
        %397 = vmatpush1.msra.mxu0 0.0
        %398 = vmatprep.subr.mxu0 0.0
        %399 = vmatpush1.msra.mxu0 0.0
        %400 = vmatprep.subr.mxu0 0.0
        %401 = vmatpush1.msra.mxu0 0.0
        %402 = vmatprep.subr.mxu0 0.0
        %403 = vmatpush1.msra.mxu0 0.0
        %404 = vmatprep.subr.mxu0 0.0
        %405 = vmatpush1.msra.mxu0 0.0
        %406 = vmatprep.subr.mxu0 0.0
        %407 = vmatpush1.msra.mxu0 0.0
        %408 = vmatprep.subr.mxu0 0.0
        %409 = vmatpush1.msra.mxu0 0.0
        %410 = vmatprep.subr.mxu0 0.0
        %411 = vmatpush1.msra.mxu0 0.0
        %412 = vmatprep.subr.mxu0 0.0
        %413 = vmatpush1.msra.mxu0 %v297
        %414 = vmatprep.subr.mxu0 0.0
        %415 = vmatpush1.msra.mxu0 %v296
        %416 = vmatprep.subr.mxu0 0.0
        %417 = vmatpush1.msra.mxu0 %v295
        %418 = vmatprep.subr.mxu0 0.0
        %419 = vmatpush1.msra.mxu0 %v294
        %420 = vmatprep.subr.mxu0 0.0
        %421 = vmatpush1.msra.mxu0 %v293
        %422 = vmatprep.subr.mxu0 0.0
        %423 = vmatpush1.msra.mxu0 %v292
        %424 = vmatprep.subr.mxu0 0.0
        %425 = vmatpush1.msra.mxu0 %v291
        %426 = vmatprep.subr.mxu0 0.0
        %427 = vmatpush1.msra.mxu0 %v290
        %428 = vmatprep.subr.mxu0 0.0
        %429 = vmatpush2.msra.mxu0 0.0
        %430 = vmatprep.subr.mxu0 0.0
        %431 = vmatpush2.msra.mxu0 0.0
        %432 = vmatprep.subr.mxu0 0.0
        %433 = vmatpush2.msra.mxu0 0.0
        %434 = vmatprep.subr.mxu0 0.0
        %435 = vmatpush2.msra.mxu0 0.0
        %436 = vmatprep.subr.mxu0 0.0
        %437 = vmatpush2.msra.mxu0 0.0
        %438 = vmatprep.subr.mxu0 0.0
        %439 = vmatpush2.msra.mxu0 0.0
        %440 = vmatprep.subr.mxu0 0.0
        %441 = vmatpush2.msra.mxu0 0.0
        %442 = vmatprep.subr.mxu0 0.0
        %443 = vmatpush2.msra.mxu0 0.0
        %444 = vmatprep.subr.mxu0 0.0
        %445 = vmatpush2.msra.mxu0 0.0
        %446 = vmatprep.subr.mxu0 0.0
        %447 = vmatpush2.msra.mxu0 0.0
        %448 = vmatprep.subr.mxu0 0.0
        %449 = vmatpush2.msra.mxu0 0.0
        %450 = vmatprep.subr.mxu0 0.0
        %451 = vmatpush2.msra.mxu0 0.0
        %452 = vmatprep.subr.mxu0 0.0
        %453 = vmatpush2.msra.mxu0 0.0
        %454 = vmatprep.subr.mxu0 0.0
        %455 = vmatpush2.msra.mxu0 0.0
        %456 = vmatprep.subr.mxu0 0.0
        %457 = vmatpush2.msra.mxu0 0.0
        %458 = vmatprep.subr.mxu0 0.0
        %459 = vmatpush2.msra.mxu0 0.0
        %460 = vmatprep.mubr.f32.mxu0 0.0
        %461 = vmatmul.mubr.f32.gmra.mxu0 %v391
        %v462 = vpop.f32.mrf.mxu0
        %v463 = vadd.f32 %v382, %v462
        %v464 = vpop.f32.mrf.mxu0
        %465 = vmatprep.mubr.f32.mxu0 0.0
        %466 = vmatmul.mubr.f32.gmra.mxu0 %v394
        %v467 = vpop.f32.mrf.mxu0
        %v468 = vadd.f32 %v387, %v467
        %v469 = vpop.f32.mrf.mxu0
        %470 = vdwg.mxu0
        %v471 = vld [vmem:[#allocation2 + $0x2] sm:$0xff]
        %v472 = vld [vmem:[#allocation2 + $0xa] sm:$0xff]
        %s473 = scalar_lea.vmem %s1, 128
        %v474 = vld [vmem:[%s473] sm:$0xff]
        %v475 = vld [vmem:[%s473 + $0x8] sm:$0xff]
        %v476 = vld [vmem:[%s473 + $0x10] sm:$0xff]
        %v477 = vld [vmem:[%s473 + $0x18] sm:$0xff]
        %v478 = vld [vmem:[%s473 + $0x20] sm:$0xff]
        %v479 = vld [vmem:[%s473 + $0x28] sm:$0xff]
        %v480 = vld [vmem:[%s473 + $0x30] sm:$0xff]
        %v481 = vld [vmem:[%s473 + $0x38] sm:$0xff]
        %v483 = vsel %vm285, %v471, 0
        %v486 = vsel %vm285, %v472, 0
        %488 = vmatprep.subr.mxu0 0.0
        %489 = vmatpush1.msra.mxu0 0.0
        %490 = vmatprep.subr.mxu0 0.0
        %491 = vmatpush1.msra.mxu0 0.0
        %492 = vmatprep.subr.mxu0 0.0
        %493 = vmatpush1.msra.mxu0 0.0
        %494 = vmatprep.subr.mxu0 0.0
        %495 = vmatpush1.msra.mxu0 0.0
        %496 = vmatprep.subr.mxu0 0.0
        %497 = vmatpush1.msra.mxu0 0.0
        %498 = vmatprep.subr.mxu0 0.0
        %499 = vmatpush1.msra.mxu0 0.0
        %500 = vmatprep.subr.mxu0 0.0
        %501 = vmatpush1.msra.mxu0 0.0
        %502 = vmatprep.subr.mxu0 0.0
        %503 = vmatpush1.msra.mxu0 0.0
        %504 = vmatprep.subr.mxu0 0.0
        %505 = vmatpush1.msra.mxu0 %v481
        %506 = vmatprep.subr.mxu0 0.0
        %507 = vmatpush1.msra.mxu0 %v480
        %508 = vmatprep.subr.mxu0 0.0
        %509 = vmatpush1.msra.mxu0 %v479
        %510 = vmatprep.subr.mxu0 0.0
        %511 = vmatpush1.msra.mxu0 %v478
        %512 = vmatprep.subr.mxu0 0.0
        %513 = vmatpush1.msra.mxu0 %v477
        %514 = vmatprep.subr.mxu0 0.0
        %515 = vmatpush1.msra.mxu0 %v476
        %516 = vmatprep.subr.mxu0 0.0
        %517 = vmatpush1.msra.mxu0 %v475
        %518 = vmatprep.subr.mxu0 0.0
        %519 = vmatpush1.msra.mxu0 %v474
        %520 = vmatprep.subr.mxu0 0.0
        %521 = vmatpush2.msra.mxu0 0.0
        %522 = vmatprep.subr.mxu0 0.0
        %523 = vmatpush2.msra.mxu0 0.0
        %524 = vmatprep.subr.mxu0 0.0
        %525 = vmatpush2.msra.mxu0 0.0
        %526 = vmatprep.subr.mxu0 0.0
        %527 = vmatpush2.msra.mxu0 0.0
        %528 = vmatprep.subr.mxu0 0.0
        %529 = vmatpush2.msra.mxu0 0.0
        %530 = vmatprep.subr.mxu0 0.0
        %531 = vmatpush2.msra.mxu0 0.0
        %532 = vmatprep.subr.mxu0 0.0
        %533 = vmatpush2.msra.mxu0 0.0
        %534 = vmatprep.subr.mxu0 0.0
        %535 = vmatpush2.msra.mxu0 0.0
        %536 = vmatprep.subr.mxu0 0.0
        %537 = vmatpush2.msra.mxu0 0.0
        %538 = vmatprep.subr.mxu0 0.0
        %539 = vmatpush2.msra.mxu0 0.0
        %540 = vmatprep.subr.mxu0 0.0
        %541 = vmatpush2.msra.mxu0 0.0
        %542 = vmatprep.subr.mxu0 0.0
        %543 = vmatpush2.msra.mxu0 0.0
        %544 = vmatprep.subr.mxu0 0.0
        %545 = vmatpush2.msra.mxu0 0.0
        %546 = vmatprep.subr.mxu0 0.0
        %547 = vmatpush2.msra.mxu0 0.0
        %548 = vmatprep.subr.mxu0 0.0
        %549 = vmatpush2.msra.mxu0 0.0
        %550 = vmatprep.subr.mxu0 0.0
        %551 = vmatpush2.msra.mxu0 0.0
        %552 = vmatprep.mubr.f32.mxu0 0.0
        %553 = vmatmul.mubr.f32.gmra.mxu0 %v483
        %v554 = vpop.f32.mrf.mxu0
        %v555 = vadd.f32 0.0, %v554
        %v556 = vpop.f32.mrf.mxu0
        %557 = vmatprep.mubr.f32.mxu0 0.0
        %558 = vmatmul.mubr.f32.gmra.mxu0 %v486
        %v559 = vpop.f32.mrf.mxu0
        %v560 = vadd.f32 0.0, %v559
        %v561 = vpop.f32.mrf.mxu0
        %562 = vdwg.mxu0
        %v563 = vadd.f32 %v463, %v555
        %v564 = vadd.f32 %v468, %v560
        %v565 = vld [vmem:[%s2] sm:$0x1]
        %v567 = vlaneseq
        %v568 = vshrl.u32 %v567, 7
        %v569 = vsub.s32 0, %v568
        %v570 = vrot.slane %v565, %v569
        %v572 = vadd.f32 %v563, %v570
        %v573 = vadd.f32 %v564, %v570
        %v574 = vmax.f32 %v572, 0.0
        %v575 = vmax.f32 %v573, 0.0
        %576 = vst [vmem:[%s274] sm:$0xff] %v574
        %577 = vst [vmem:[%s274 + $0x8] sm:$0xff] %v575
        %578 = vst [vmem:[#allocation3] sm:$0x1] 0.0
        %579 = vst [vmem:[#allocation3 + $0x11] sm:$0x1] 0.0
        %580 = vst [vmem:[#allocation3 + $0x1] sm:$0xff] %v574
        %581 = vst [vmem:[#allocation3 + $0x9] sm:$0xff] %v575
        %v582 = vld [vmem:[#allocation3] sm:$0xff]
        %v583 = vld [vmem:[#allocation3 + $0x8] sm:$0xff]
        %v584 = vld [vmem:[#allocation4] sm:$0xff]
        %v585 = vld [vmem:[#allocation4 + $0x8] sm:$0xff]
        %v586 = vld [vmem:[#allocation4 + $0x10] sm:$0xff]
        %v587 = vld [vmem:[#allocation4 + $0x18] sm:$0xff]
        %v588 = vld [vmem:[#allocation4 + $0x20] sm:$0xff]
        %v589 = vld [vmem:[#allocation4 + $0x28] sm:$0xff]
        %v590 = vld [vmem:[#allocation4 + $0x30] sm:$0xff]
        %v591 = vld [vmem:[#allocation4 + $0x38] sm:$0xff]
        %v592 = vld [vmem:[#allocation4 + $0x40] sm:$0xff]
        %v593 = vld [vmem:[#allocation4 + $0x48] sm:$0xff]
        %v594 = vld [vmem:[#allocation4 + $0x50] sm:$0xff]
        %v595 = vld [vmem:[#allocation4 + $0x58] sm:$0xff]
        %v596 = vld [vmem:[#allocation4 + $0x60] sm:$0xff]
        %v597 = vld [vmem:[#allocation4 + $0x68] sm:$0xff]
        %v598 = vld [vmem:[#allocation4 + $0x70] sm:$0xff]
        %v599 = vld [vmem:[#allocation4 + $0x78] sm:$0xff]
        %v600 = vld [vmem:[#allocation4 + $0x80] sm:$0xff]
        %v601 = vld [vmem:[#allocation4 + $0x88] sm:$0xff]
        %v602 = vld [vmem:[#allocation4 + $0x90] sm:$0xff]
        %v603 = vld [vmem:[#allocation4 + $0x98] sm:$0xff]
        %v604 = vld [vmem:[#allocation4 + $0xa0] sm:$0xff]
        %v605 = vld [vmem:[#allocation4 + $0xa8] sm:$0xff]
        %v606 = vld [vmem:[#allocation4 + $0xb0] sm:$0xff]
        %v607 = vld [vmem:[#allocation4 + $0xb8] sm:$0xff]
        %v608 = vld [vmem:[#allocation4 + $0xc0] sm:$0xff]
        %v609 = vld [vmem:[#allocation4 + $0xc8] sm:$0xff]
        %v610 = vld [vmem:[#allocation4 + $0xd0] sm:$0xff]
        %v611 = vld [vmem:[#allocation4 + $0xd8] sm:$0xff]
        %v612 = vld [vmem:[#allocation4 + $0xe0] sm:$0xff]
        %v613 = vld [vmem:[#allocation4 + $0xe8] sm:$0xff]
        %v614 = vld [vmem:[#allocation4 + $0xf0] sm:$0xff]
        %v615 = vld [vmem:[#allocation4 + $0xf8] sm:$0xff]
        %v616 = vld [vmem:[#allocation3 + $0x1] sm:$0xff]
        %v617 = vld [vmem:[#allocation3 + $0x9] sm:$0xff]
        %s618 = scalar_lea.vmem [#allocation4], 256
        %v619 = vld [vmem:[%s618] sm:$0xff]
        %v620 = vld [vmem:[%s618 + $0x8] sm:$0xff]
        %v621 = vld [vmem:[%s618 + $0x10] sm:$0xff]
        %v622 = vld [vmem:[%s618 + $0x18] sm:$0xff]
        %v623 = vld [vmem:[%s618 + $0x20] sm:$0xff]
        %v624 = vld [vmem:[%s618 + $0x28] sm:$0xff]
        %v625 = vld [vmem:[%s618 + $0x30] sm:$0xff]
        %v626 = vld [vmem:[%s618 + $0x38] sm:$0xff]
        %v627 = vld [vmem:[%s618 + $0x40] sm:$0xff]
        %v628 = vld [vmem:[%s618 + $0x48] sm:$0xff]
        %v629 = vld [vmem:[%s618 + $0x50] sm:$0xff]
        %v630 = vld [vmem:[%s618 + $0x58] sm:$0xff]
        %v631 = vld [vmem:[%s618 + $0x60] sm:$0xff]
        %v632 = vld [vmem:[%s618 + $0x68] sm:$0xff]
        %v633 = vld [vmem:[%s618 + $0x70] sm:$0xff]
        %v634 = vld [vmem:[%s618 + $0x78] sm:$0xff]
        %v635 = vld [vmem:[%s618 + $0x80] sm:$0xff]
        %v636 = vld [vmem:[%s618 + $0x88] sm:$0xff]
        %v637 = vld [vmem:[%s618 + $0x90] sm:$0xff]
        %v638 = vld [vmem:[%s618 + $0x98] sm:$0xff]
        %v639 = vld [vmem:[%s618 + $0xa0] sm:$0xff]
        %v640 = vld [vmem:[%s618 + $0xa8] sm:$0xff]
        %v641 = vld [vmem:[%s618 + $0xb0] sm:$0xff]
        %v642 = vld [vmem:[%s618 + $0xb8] sm:$0xff]
        %v643 = vld [vmem:[%s618 + $0xc0] sm:$0xff]
        %v644 = vld [vmem:[%s618 + $0xc8] sm:$0xff]
        %v645 = vld [vmem:[%s618 + $0xd0] sm:$0xff]
        %v646 = vld [vmem:[%s618 + $0xd8] sm:$0xff]
        %v647 = vld [vmem:[%s618 + $0xe0] sm:$0xff]
        %v648 = vld [vmem:[%s618 + $0xe8] sm:$0xff]
        %v649 = vld [vmem:[%s618 + $0xf0] sm:$0xff]
        %v650 = vld [vmem:[%s618 + $0xf8] sm:$0xff]
        %651 = vmatprep.subr.mxu0 %v650
        %652 = vmatpush1.msra.mxu0 %v649
        %653 = vmatprep.subr.mxu0 %v648
        %654 = vmatpush1.msra.mxu0 %v647
        %655 = vmatprep.subr.mxu0 %v646
        %656 = vmatpush1.msra.mxu0 %v645
        %657 = vmatprep.subr.mxu0 %v644
        %658 = vmatpush1.msra.mxu0 %v643
        %659 = vmatprep.subr.mxu0 %v642
        %660 = vmatpush1.msra.mxu0 %v641
        %661 = vmatprep.subr.mxu0 %v640
        %662 = vmatpush1.msra.mxu0 %v639
        %663 = vmatprep.subr.mxu0 %v638
        %664 = vmatpush1.msra.mxu0 %v637
        %665 = vmatprep.subr.mxu0 %v636
        %666 = vmatpush1.msra.mxu0 %v635
        %667 = vmatprep.subr.mxu0 %v634
        %668 = vmatpush1.msra.mxu0 %v633
        %669 = vmatprep.subr.mxu0 %v632
        %670 = vmatpush1.msra.mxu0 %v631
        %671 = vmatprep.subr.mxu0 %v630
        %672 = vmatpush1.msra.mxu0 %v629
        %673 = vmatprep.subr.mxu0 %v628
        %674 = vmatpush1.msra.mxu0 %v627
        %675 = vmatprep.subr.mxu0 %v626
        %676 = vmatpush1.msra.mxu0 %v625
        %677 = vmatprep.subr.mxu0 %v624
        %678 = vmatpush1.msra.mxu0 %v623
        %679 = vmatprep.subr.mxu0 %v622
        %680 = vmatpush1.msra.mxu0 %v621
        %681 = vmatprep.subr.mxu0 %v620
        %682 = vmatpush1.msra.mxu0 %v619
        %683 = vmatprep.subr.mxu0 0.0
        %684 = vmatpush2.msra.mxu0 0.0
        %685 = vmatprep.subr.mxu0 0.0
        %686 = vmatpush2.msra.mxu0 0.0
        %687 = vmatprep.subr.mxu0 0.0
        %688 = vmatpush2.msra.mxu0 0.0
        %689 = vmatprep.subr.mxu0 0.0
        %690 = vmatpush2.msra.mxu0 0.0
        %691 = vmatprep.subr.mxu0 0.0
        %692 = vmatpush2.msra.mxu0 0.0
        %693 = vmatprep.subr.mxu0 0.0
        %694 = vmatpush2.msra.mxu0 0.0
        %695 = vmatprep.subr.mxu0 0.0
        %696 = vmatpush2.msra.mxu0 0.0
        %697 = vmatprep.subr.mxu0 0.0
        %698 = vmatpush2.msra.mxu0 0.0
        %699 = vmatprep.subr.mxu0 0.0
        %700 = vmatpush2.msra.mxu0 0.0
        %701 = vmatprep.subr.mxu0 0.0
        %702 = vmatpush2.msra.mxu0 0.0
        %703 = vmatprep.subr.mxu0 0.0
        %704 = vmatpush2.msra.mxu0 0.0
        %705 = vmatprep.subr.mxu0 0.0
        %706 = vmatpush2.msra.mxu0 0.0
        %707 = vmatprep.subr.mxu0 0.0
        %708 = vmatpush2.msra.mxu0 0.0
        %709 = vmatprep.subr.mxu0 0.0
        %710 = vmatpush2.msra.mxu0 0.0
        %711 = vmatprep.subr.mxu0 0.0
        %712 = vmatpush2.msra.mxu0 0.0
        %713 = vmatprep.subr.mxu0 0.0
        %714 = vmatpush2.msra.mxu0 0.0
        %715 = vmatprep.mubr.f32.mxu0 0.0
        %716 = vmatmul.mubr.f32.gmra.mxu0 %v616
        %v717 = vpop.f32.mrf.mxu0
        %v718 = vadd.f32 0.0, %v717
        %v719 = vpop.f32.mrf.mxu0
        %v720 = vadd.f32 0.0, %v719
        %721 = vmatprep.mubr.f32.mxu0 0.0
        %722 = vmatmul.mubr.f32.gmra.mxu0 %v617
        %v723 = vpop.f32.mrf.mxu0
        %v724 = vadd.f32 0.0, %v723
        %v725 = vpop.f32.mrf.mxu0
        %v726 = vadd.f32 0.0, %v725
        %727 = vdwg.mxu0
        %728 = vmatprep.subr.mxu0 %v615
        %729 = vmatpush1.msra.mxu0 %v614
        %730 = vmatprep.subr.mxu0 %v613
        %731 = vmatpush1.msra.mxu0 %v612
        %732 = vmatprep.subr.mxu0 %v611
        %733 = vmatpush1.msra.mxu0 %v610
        %734 = vmatprep.subr.mxu0 %v609
        %735 = vmatpush1.msra.mxu0 %v608
        %736 = vmatprep.subr.mxu0 %v607
        %737 = vmatpush1.msra.mxu0 %v606
        %738 = vmatprep.subr.mxu0 %v605
        %739 = vmatpush1.msra.mxu0 %v604
        %740 = vmatprep.subr.mxu0 %v603
        %741 = vmatpush1.msra.mxu0 %v602
        %742 = vmatprep.subr.mxu0 %v601
        %743 = vmatpush1.msra.mxu0 %v600
        %744 = vmatprep.subr.mxu0 %v599
        %745 = vmatpush1.msra.mxu0 %v598
        %746 = vmatprep.subr.mxu0 %v597
        %747 = vmatpush1.msra.mxu0 %v596
        %748 = vmatprep.subr.mxu0 %v595
        %749 = vmatpush1.msra.mxu0 %v594
        %750 = vmatprep.subr.mxu0 %v593
        %751 = vmatpush1.msra.mxu0 %v592
        %752 = vmatprep.subr.mxu0 %v591
        %753 = vmatpush1.msra.mxu0 %v590
        %754 = vmatprep.subr.mxu0 %v589
        %755 = vmatpush1.msra.mxu0 %v588
        %756 = vmatprep.subr.mxu0 %v587
        %757 = vmatpush1.msra.mxu0 %v586
        %758 = vmatprep.subr.mxu0 %v585
        %759 = vmatpush1.msra.mxu0 %v584
        %760 = vmatprep.subr.mxu0 0.0
        %761 = vmatpush2.msra.mxu0 0.0
        %762 = vmatprep.subr.mxu0 0.0
        %763 = vmatpush2.msra.mxu0 0.0
        %764 = vmatprep.subr.mxu0 0.0
        %765 = vmatpush2.msra.mxu0 0.0
        %766 = vmatprep.subr.mxu0 0.0
        %767 = vmatpush2.msra.mxu0 0.0
        %768 = vmatprep.subr.mxu0 0.0
        %769 = vmatpush2.msra.mxu0 0.0
        %770 = vmatprep.subr.mxu0 0.0
        %771 = vmatpush2.msra.mxu0 0.0
        %772 = vmatprep.subr.mxu0 0.0
        %773 = vmatpush2.msra.mxu0 0.0
        %774 = vmatprep.subr.mxu0 0.0
        %775 = vmatpush2.msra.mxu0 0.0
        %776 = vmatprep.subr.mxu0 0.0
        %777 = vmatpush2.msra.mxu0 0.0
        %778 = vmatprep.subr.mxu0 0.0
        %779 = vmatpush2.msra.mxu0 0.0
        %780 = vmatprep.subr.mxu0 0.0
        %781 = vmatpush2.msra.mxu0 0.0
        %782 = vmatprep.subr.mxu0 0.0
        %783 = vmatpush2.msra.mxu0 0.0
        %784 = vmatprep.subr.mxu0 0.0
        %785 = vmatpush2.msra.mxu0 0.0
        %786 = vmatprep.subr.mxu0 0.0
        %787 = vmatpush2.msra.mxu0 0.0
        %788 = vmatprep.subr.mxu0 0.0
        %789 = vmatpush2.msra.mxu0 0.0
        %790 = vmatprep.subr.mxu0 0.0
        %791 = vmatpush2.msra.mxu0 0.0
        %792 = vmatprep.mubr.f32.mxu0 0.0
        %793 = vmatmul.mubr.f32.gmra.mxu0 %v582
        %v794 = vpop.f32.mrf.mxu0
        %v795 = vadd.f32 %v718, %v794
        %v796 = vpop.f32.mrf.mxu0
        %v797 = vadd.f32 %v720, %v796
        %798 = vmatprep.mubr.f32.mxu0 0.0
        %799 = vmatmul.mubr.f32.gmra.mxu0 %v583
        %v800 = vpop.f32.mrf.mxu0
        %v801 = vadd.f32 %v724, %v800
        %v802 = vpop.f32.mrf.mxu0
        %v803 = vadd.f32 %v726, %v802
        %804 = vdwg.mxu0
        %v805 = vld [vmem:[#allocation3 + $0x2] sm:$0xff]
        %v806 = vld [vmem:[#allocation3 + $0xa] sm:$0xff]
        %s807 = scalar_lea.vmem [#allocation4], 512
        %v808 = vld [vmem:[%s807] sm:$0xff]
        %v809 = vld [vmem:[%s807 + $0x8] sm:$0xff]
        %v810 = vld [vmem:[%s807 + $0x10] sm:$0xff]
        %v811 = vld [vmem:[%s807 + $0x18] sm:$0xff]
        %v812 = vld [vmem:[%s807 + $0x20] sm:$0xff]
        %v813 = vld [vmem:[%s807 + $0x28] sm:$0xff]
        %v814 = vld [vmem:[%s807 + $0x30] sm:$0xff]
        %v815 = vld [vmem:[%s807 + $0x38] sm:$0xff]
        %v816 = vld [vmem:[%s807 + $0x40] sm:$0xff]
        %v817 = vld [vmem:[%s807 + $0x48] sm:$0xff]
        %v818 = vld [vmem:[%s807 + $0x50] sm:$0xff]
        %v819 = vld [vmem:[%s807 + $0x58] sm:$0xff]
        %v820 = vld [vmem:[%s807 + $0x60] sm:$0xff]
        %v821 = vld [vmem:[%s807 + $0x68] sm:$0xff]
        %v822 = vld [vmem:[%s807 + $0x70] sm:$0xff]
        %v823 = vld [vmem:[%s807 + $0x78] sm:$0xff]
        %v824 = vld [vmem:[%s807 + $0x80] sm:$0xff]
        %v825 = vld [vmem:[%s807 + $0x88] sm:$0xff]
        %v826 = vld [vmem:[%s807 + $0x90] sm:$0xff]
        %v827 = vld [vmem:[%s807 + $0x98] sm:$0xff]
        %v828 = vld [vmem:[%s807 + $0xa0] sm:$0xff]
        %v829 = vld [vmem:[%s807 + $0xa8] sm:$0xff]
        %v830 = vld [vmem:[%s807 + $0xb0] sm:$0xff]
        %v831 = vld [vmem:[%s807 + $0xb8] sm:$0xff]
        %v832 = vld [vmem:[%s807 + $0xc0] sm:$0xff]
        %v833 = vld [vmem:[%s807 + $0xc8] sm:$0xff]
        %v834 = vld [vmem:[%s807 + $0xd0] sm:$0xff]
        %v835 = vld [vmem:[%s807 + $0xd8] sm:$0xff]
        %v836 = vld [vmem:[%s807 + $0xe0] sm:$0xff]
        %v837 = vld [vmem:[%s807 + $0xe8] sm:$0xff]
        %v838 = vld [vmem:[%s807 + $0xf0] sm:$0xff]
        %v839 = vld [vmem:[%s807 + $0xf8] sm:$0xff]
        %840 = vmatprep.subr.mxu0 %v839
        %841 = vmatpush1.msra.mxu0 %v838
        %842 = vmatprep.subr.mxu0 %v837
        %843 = vmatpush1.msra.mxu0 %v836
        %844 = vmatprep.subr.mxu0 %v835
        %845 = vmatpush1.msra.mxu0 %v834
        %846 = vmatprep.subr.mxu0 %v833
        %847 = vmatpush1.msra.mxu0 %v832
        %848 = vmatprep.subr.mxu0 %v831
        %849 = vmatpush1.msra.mxu0 %v830
        %850 = vmatprep.subr.mxu0 %v829
        %851 = vmatpush1.msra.mxu0 %v828
        %852 = vmatprep.subr.mxu0 %v827
        %853 = vmatpush1.msra.mxu0 %v826
        %854 = vmatprep.subr.mxu0 %v825
        %855 = vmatpush1.msra.mxu0 %v824
        %856 = vmatprep.subr.mxu0 %v823
        %857 = vmatpush1.msra.mxu0 %v822
        %858 = vmatprep.subr.mxu0 %v821
        %859 = vmatpush1.msra.mxu0 %v820
        %860 = vmatprep.subr.mxu0 %v819
        %861 = vmatpush1.msra.mxu0 %v818
        %862 = vmatprep.subr.mxu0 %v817
        %863 = vmatpush1.msra.mxu0 %v816
        %864 = vmatprep.subr.mxu0 %v815
        %865 = vmatpush1.msra.mxu0 %v814
        %866 = vmatprep.subr.mxu0 %v813
        %867 = vmatpush1.msra.mxu0 %v812
        %868 = vmatprep.subr.mxu0 %v811
        %869 = vmatpush1.msra.mxu0 %v810
        %870 = vmatprep.subr.mxu0 %v809
        %871 = vmatpush1.msra.mxu0 %v808
        %872 = vmatprep.subr.mxu0 0.0
        %873 = vmatpush2.msra.mxu0 0.0
        %874 = vmatprep.subr.mxu0 0.0
        %875 = vmatpush2.msra.mxu0 0.0
        %876 = vmatprep.subr.mxu0 0.0
        %877 = vmatpush2.msra.mxu0 0.0
        %878 = vmatprep.subr.mxu0 0.0
        %879 = vmatpush2.msra.mxu0 0.0
        %880 = vmatprep.subr.mxu0 0.0
        %881 = vmatpush2.msra.mxu0 0.0
        %882 = vmatprep.subr.mxu0 0.0
        %883 = vmatpush2.msra.mxu0 0.0
        %884 = vmatprep.subr.mxu0 0.0
        %885 = vmatpush2.msra.mxu0 0.0
        %886 = vmatprep.subr.mxu0 0.0
        %887 = vmatpush2.msra.mxu0 0.0
        %888 = vmatprep.subr.mxu0 0.0
        %889 = vmatpush2.msra.mxu0 0.0
        %890 = vmatprep.subr.mxu0 0.0
        %891 = vmatpush2.msra.mxu0 0.0
        %892 = vmatprep.subr.mxu0 0.0
        %893 = vmatpush2.msra.mxu0 0.0
        %894 = vmatprep.subr.mxu0 0.0
        %895 = vmatpush2.msra.mxu0 0.0
        %896 = vmatprep.subr.mxu0 0.0
        %897 = vmatpush2.msra.mxu0 0.0
        %898 = vmatprep.subr.mxu0 0.0
        %899 = vmatpush2.msra.mxu0 0.0
        %900 = vmatprep.subr.mxu0 0.0
        %901 = vmatpush2.msra.mxu0 0.0
        %902 = vmatprep.subr.mxu0 0.0
        %903 = vmatpush2.msra.mxu0 0.0
        %904 = vmatprep.mubr.f32.mxu0 0.0
        %905 = vmatmul.mubr.f32.gmra.mxu0 %v805
        %v906 = vpop.f32.mrf.mxu0
        %v907 = vadd.f32 0.0, %v906
        %v908 = vpop.f32.mrf.mxu0
        %v909 = vadd.f32 0.0, %v908
        %910 = vmatprep.mubr.f32.mxu0 0.0
        %911 = vmatmul.mubr.f32.gmra.mxu0 %v806
        %v912 = vpop.f32.mrf.mxu0
        %v913 = vadd.f32 0.0, %v912
        %v914 = vpop.f32.mrf.mxu0
        %v915 = vadd.f32 0.0, %v914
        %916 = vdwg.mxu0
        %v917 = vadd.f32 %v795, %v907
        %v918 = vadd.f32 %v797, %v909
        %v919 = vadd.f32 %v801, %v913
        %v920 = vadd.f32 %v803, %v915
        %v921 = vld [vmem:[%s4] sm:$0x3]
        %v923 = vlaneseq
        %v924 = vshrl.u32 %v923, 7
        %v925 = vsub.s32 0, %v924
        %v926 = vrot.slane %v921, %v925
        %v927 = vlaneseq
        %v928 = vshrl.u32 %v927, 7
        %v929 = vsub.s32 1, %v928
        %v930 = vrot.slane %v921, %v929
        %v933 = vadd.f32 %v917, %v926
        %v934 = vadd.f32 %v918, %v930
        %v935 = vadd.f32 %v919, %v926
        %v936 = vadd.f32 %v920, %v930
        %v937 = vmax.f32 %v933, 0.0
        %v938 = vmax.f32 %v934, 0.0
        %v939 = vmax.f32 %v935, 0.0
        %v940 = vmax.f32 %v936, 0.0
        %941 = vst [vmem:[%s279] sm:$0xff] %v937
        %942 = vst [vmem:[%s279 + $0x8] sm:$0xff] %v938
        %943 = vst [vmem:[%s279 + $0x10] sm:$0xff] %v939
        %944 = vst [vmem:[%s279 + $0x18] sm:$0xff] %v940
        %p945 = scmp.lt.s32.totalorder %s19, 1
        %s946 = scalar_select %p945, %s19, 1
        %s947 = smul.addr %s946, 2
        %s948 = smul.addr %s947, 8
        %s949 = scalar_lea.vmem %s5, %s948
        %p950 = scmp.lt.s32.totalorder %s19, 1
        %s951 = scalar_select %p950, %s19, 1
        %s952 = smul.addr %s951, 4
        %s953 = smul.addr %s952, 8
        %s954 = scalar_lea.vmem %s6, %s953
        // Predicated region
        $region45: #{_forward_impl.1} parent=39 // pred_check
          %p955 = pneg %p147
        $region46: #{_forward_impl.1} parent=39 // pred_check_branch
          %957 = sbr.rel (%p955) target = $region48
        $region47: #{_forward_impl.1} parent=39 // pred_region
          _
        $region48: #{_forward_impl.1} parent=39 // pred_fallthru
          _
        // Predicated region
        $region49: #{_forward_impl.1} parent=39 // pred_check
          %p958 = pneg %p173
        $region50: #{_forward_impl.1} parent=39 // pred_check_branch
          %960 = sbr.rel (%p958) target = $region52
        $region51: #{_forward_impl.1} parent=39 // pred_region
          _
        $region52: #{_forward_impl.1} parent=39 // pred_fallthru
          _
      $region40: #{_forward_impl.1} parent=5 // pred_fallthru
        _
      %p961 = scmp.le.s32.totalorder 2, %s14
      // Predicated region
      $region53: #{_forward_impl.1} parent=5 // pred_check
        %p962 = pneg %p961
      $region54: #{_forward_impl.1} parent=5 // pred_check_branch
        %964 = sbr.rel (%p962) target = $region56
      $region55: #{_forward_impl.1} parent=5 // pred_region
        %s965 = ssub.s32 %s14, 2
        // Predicated region
        $region57: #{_forward_impl.1} parent=55 // pred_check
          %p966 = pneg %p153
        $region58: #{_forward_impl.1} parent=55 // pred_check_branch
          %968 = sbr.rel (%p966) target = $region60
        $region59: #{_forward_impl.1} parent=55 // pred_region
          %p969 = scmp.lt.s32.totalorder %s20, 1
          %s970 = scalar_select %p969, %s20, 1
          %s971 = smul.addr %s970, 2
          %s972 = smul.addr %s971, 8
          %s973 = scalar_lea.vmem %s5, %s972
        $region60: #{_forward_impl.1} parent=55 // pred_fallthru
          _
        // Predicated region
        $region61: #{_forward_impl.1} parent=55 // pred_check
          %p974 = pneg %p179
        $region62: #{_forward_impl.1} parent=55 // pred_check_branch
          %976 = sbr.rel (%p974) target = $region64
        $region63: #{_forward_impl.1} parent=55 // pred_region
          %p977 = scmp.lt.s32.totalorder %s20, 1
          %s978 = scalar_select %p977, %s20, 1
          %s979 = smul.addr %s978, 4
          %s980 = smul.addr %s979, 8
          %s981 = scalar_lea.vmem %s6, %s980
        $region64: #{_forward_impl.1} parent=55 // pred_fallthru
          _
      $region56: #{_forward_impl.1} parent=5 // pred_fallthru
        _
    $region6: #{_forward_impl.1} parent=1 // loop_footer
      %s18 = sadd.s32 1, %s14
    $region7: #{_forward_impl.1} parent=1 // loop_footer_branch
      %13 = sbr.rel target = $region3
    $region8: #{_forward_impl.1} parent=1 // loop_exit
      _
    %982 = vsyncpa [#allocation5], 1
    %s983 = scalar_lea.sflag [#allocation5], 1
    %984 = vsyncpa %s983, 1

</llo_original>
